<compile_context>
chip_gen: v6e
topology: v6e:2x2x1
jax: 0.10.0
libtpu: 0.0.40
codegen_flags: <defaults>
</compile_context>

<pallas_src>
import functools

import jax
import jax.numpy as jnp
from jax.experimental import pallas as pl
from jax.experimental.pallas import tpu as pltpu


def _l2_norm_kernel(x_ref, o_ref, *, eps):
    # x_ref: (tile_rows, D) block in VMEM; reduce along the lane (feature) axis.
    x = x_ref[...].astype(jnp.float32)
    sq_sum = jnp.sum(x * x, axis=-1, keepdims=True)
    # torch.nn.functional.normalize: y = x / max(||x||, eps)
    #   1 / max(sqrt(s), eps) == rsqrt(max(s, eps*eps)); eps*eps = 1e-24 is a
    #   normal f32, and lax.rsqrt is the precise (non-approx) EUP rsqrt.
    inv = jax.lax.rsqrt(jnp.maximum(sq_sum, jnp.float32(eps) * jnp.float32(eps)))
    o_ref[...] = (x * inv).astype(o_ref.dtype)


def _round_up(v, m):
    return ((v + m - 1) // m) * m


def _vmem_capacity_bytes():
    try:
        info = pltpu.get_tpu_info()
        cap = int(getattr(info, "vmem_capacity_bytes", 0))
        if cap > 0:
            return cap
    except Exception:
        pass
    return 64 * 1024 * 1024  # conservative fallback (v7x-sized VMEM)


def _select_tiling(B, D, dtype):
    itemsize = jnp.dtype(dtype).itemsize
    # Sublane alignment: 8 rows for f32, 16 for bf16, 32 for 8-bit dtypes.
    align = max(8, 32 // itemsize)

    cap = _vmem_capacity_bytes()
    # Scoped-VMEM request: half of physical (64 MiB on v5e/v6e, 32 MiB on v7x).
    vmem_limit = min(cap // 2, 96 * 1024 * 1024)
    # Per-block budget: ~4 MiB of f32-equivalent footprint, and never more than
    # 1/8 of the scoped limit, so double-buffered in+out blocks plus the f32
    # compute temporaries stay comfortably inside VMEM on every generation.
    per_block = min(vmem_limit // 8, 4 * 1024 * 1024)
    bytes_per_row = D * max(itemsize, 4)  # account for the in-kernel f32 copy
    tile_rows = max(align, (per_block // bytes_per_row) // align * align)

    # Don't tile past the (sublane-aligned) batch.
    tile_rows = min(tile_rows, _round_up(B, align))
    # Keep >= 2 grid steps when possible so the "parallel" batch axis can be
    # sharded across the 2 TensorCores on v7x.
    if -(-B // tile_rows) < 2 and B > 2 * align:
        tile_rows = _round_up(-(-B // 2), align)

    return tile_rows, vmem_limit


def l2_normalize(x, eps=1e-12, tile_rows=None):
    """L2-normalize rows of a (B, D) array along dim=1 (PyTorch F.normalize)."""
    B, D = x.shape
    if tile_rows is None:
        tile_rows, vmem_limit = _select_tiling(B, D, x.dtype)
    else:
        vmem_limit = min(_vmem_capacity_bytes() // 2, 96 * 1024 * 1024)

    grid = (pl.cdiv(B, tile_rows),)
    # TODO(synk): for very wide D (>= 8K) add a second 'arbitrary' grid axis over
    # D with a VMEM sq-sum accumulator instead of loading the full row per block.
    return pl.pallas_call(
        functools.partial(_l2_norm_kernel, eps=eps),
        out_shape=jax.ShapeDtypeStruct((B, D), x.dtype),
        grid=grid,
        in_specs=[pl.BlockSpec((tile_rows, D), lambda i: (i, 0))],
        out_specs=pl.BlockSpec((tile_rows, D), lambda i: (i, 0)),
        compiler_params=pltpu.CompilerParams(
            dimension_semantics=("parallel",),
            vmem_limit_bytes=int(vmem_limit),
        ),
    )(x)


def _ref_l2_normalize(x, eps=1e-12):
    xf = x.astype(jnp.float32)
    norm = jnp.sqrt(jnp.sum(xf * xf, axis=1, keepdims=True))
    return (xf / jnp.maximum(norm, eps)).astype(x.dtype)


if __name__ == "__main__":
    key = jax.random.PRNGKey(0)
    k0, k1, k2 = jax.random.split(key, 3)

    # Shapes consistent with the module: L2_Norm_Layer sits inside the dino
    # projector and normalizes (batch, prjBotDim=256) activations along dim=1.
    B, D = 512, 256
    x = jax.random.normal(k0, (B, D), dtype=jnp.float32) * 3.0
    y = jax.block_until_ready(l2_normalize(x))
    y_ref = _ref_l2_normalize(x)
    assert jnp.allclose(y, y_ref, atol=1e-5, rtol=1e-5), "f32 mismatch vs reference"
    assert jnp.allclose(jnp.linalg.norm(y, axis=1), 1.0, atol=1e-5), "row norms != 1"

    # Batch not divisible by the auto-selected tile: exercises the padded tail
    # block handled by the pl.cdiv grid (masked on writeback).
    B2 = 200
    x2 = jax.random.normal(k1, (B2, D), dtype=jnp.float32)
    y2 = jax.block_until_ready(l2_normalize(x2))
    assert jnp.allclose(y2, _ref_l2_normalize(x2), atol=1e-5, rtol=1e-5), \
        "ragged-batch mismatch vs reference"

    # bf16 path (16-row sublane alignment; f32 math inside the kernel).
    x3 = jax.random.normal(k2, (B, D), dtype=jnp.float32).astype(jnp.bfloat16)
    y3 = jax.block_until_ready(l2_normalize(x3))
    y3_ref = _ref_l2_normalize(x3)
    assert jnp.allclose(y3.astype(jnp.float32), y3_ref.astype(jnp.float32),
                        atol=1e-2, rtol=1e-2), "bf16 mismatch vs reference"

    print("KERNEL_OK")
</pallas_src>

<mosaic_0001>
module attributes {stable_mosaic.version = 11 : i64} {
  func.func @_l2_norm_kernel(%arg0: i32, %arg1: memref<256x256xf32, #tpu.memory_space<vmem>>, %arg2: memref<256x256xf32, #tpu.memory_space<vmem>>) attributes {dimension_semantics = [#tpu.dimension_semantics<parallel>], iteration_bounds = array<i64: 2>, scalar_prefetch = 0 : i64, scratch_operands = 0 : i64, tpu.core_type = #tpu.core_type<tc>, window_params = [{transform_indices = @transform_0, window_bounds = array<i64: 256, 256>}, {transform_indices = @transform_1, window_bounds = array<i64: 256, 256>}]} {
    %c0 = arith.constant 0 : index
    %c0_0 = arith.constant 0 : index
    %0 = vector.load %arg1[%c0, %c0_0] : memref<256x256xf32, #tpu.memory_space<vmem>>, vector<256x256xf32>
    %1 = arith.mulf %0, %0 : vector<256x256xf32>
    %cst = arith.constant dense<0.000000e+00> : vector<256xf32>
    %2 = vector.multi_reduction <add>, %1, %cst [1] : vector<256x256xf32> to vector<256xf32>
    %3 = vector.shape_cast %2 : vector<256xf32> to vector<256x1xf32>
    %cst_1 = arith.constant 9.99999996E-13 : f32
    %cst_2 = arith.constant 9.99999996E-13 : f32
    %4 = arith.mulf %cst_1, %cst_2 : f32
    %5 = vector.broadcast %4 : f32 to vector<256x1xf32>
    %6 = arith.maximumf %3, %5 : vector<256x1xf32>
    %7 = math.rsqrt %6 : vector<256x1xf32>
    %8 = vector.broadcast %7 : vector<256x1xf32> to vector<256x256xf32>
    %9 = arith.mulf %0, %8 : vector<256x256xf32>
    %c0_3 = arith.constant 0 : index
    %c0_4 = arith.constant 0 : index
    %10 = vector.load %arg2[%c0_3, %c0_4] : memref<256x256xf32, #tpu.memory_space<vmem>>, vector<256x256xf32>
    tpu.vector_store %arg2[%c0_3, %c0_4], %9 {strides = array<i32>} : memref<256x256xf32, #tpu.memory_space<vmem>>, vector<256x256xf32>,
    return
  }
  func.func @transform_0(%arg0: i32) -> (i32, i32) {
    %c0_i32 = arith.constant 0 : i32
    %c0_i32_0 = arith.constant 0 : i32
    return %arg0, %c0_i32 : i32, i32
  }
  func.func @transform_1(%arg0: i32) -> (i32, i32) {
    %c0_i32 = arith.constant 0 : i32
    %c0_i32_0 = arith.constant 0 : i32
    return %arg0, %c0_i32 : i32, i32
  }
}

</mosaic_0001>

<llo_original>
// kernel: tpu_custom_call.1
$region0: #{tpu_custom_call.1}
  #allocation0 [shape = 'u32[]', space=smem, size = 0x4, offset = 0x4, fixed_abs, tag = 'smem constant byte address 0x4 - core index']
  #allocation1 [shape = 'u32[144,128]{1,0:T(1,128)}', space=vmem, size = 0x12000, scoped, tag = 'internal scratch']
  %s0 = inlined_call_operand.hbm [shape: f32[512,256], index: 0, kind: input, shape index: {}]
  %s1 = inlined_call_operand.hbm [shape: f32[512,256], index: 1, kind: output, shape index: {}]
  %s2 = sld [smem:[#allocation0]]
  $region41: #{tpu_custom_call.1} parent=0
    _
  %s4 = ssub.s32 1, %s2
  %s5 = scalar_select 0, %s4, %s2
  $region1: #{tpu_custom_call.1} parent=0
    #allocation2 [shape = 'u8[524288]{0}', space=vmem, size = 0x80000, scoped, tag = 'input window, operand 0']
    #allocation3 [shape = 's32[2]{0}', space=sflag, size = 0x8, scoped, tag = 'scoped memory for tpu_custom_call.1']
    #allocation4 [shape = 's32[2]{0}', space=sflag, size = 0x8, scoped, tag = 'scoped memory for tpu_custom_call.1']
    #allocation5 [shape = 'u8[524288]{0}', space=vmem, size = 0x80000, scoped, tag = 'output window, operand 0']
    %6 = vsyncpa [#allocation3], 0
    %s7 = scalar_lea.sflag [#allocation3], 1
    %8 = vsyncpa %s7, 0
    %9 = vsyncpa [#allocation4], 0
    %s10 = scalar_lea.sflag [#allocation4], 1
    %11 = vsyncpa %s10, 0
    loop: start=0, step=1, limit=4
    $region2: #{tpu_custom_call.1} parent=1 // loop_pre_header
      _
    $region3: #{tpu_custom_call.1} parent=1 // loop_header
      %s13 = sphi 0, %s17
      %p14 = scmp.ge.s32.totalorder %s13, 4
      %s23 = sphi 0, %s25
      %s26 = sphi 0, %s23
      %s27 = sphi 0, %s26
      %s43 = sphi 0, %s27
      %s49 = sphi 0, %s51
      %s52 = sphi 0, %s49
      %s53 = sphi 0, %s52
      %s69 = sphi 0, %s53
    $region4: #{tpu_custom_call.1} parent=1 // loop_header_branch
      %16 = sbr.rel (%p14) target = $region8
    $region5: #{tpu_custom_call.1} parent=1 // loop_body
      %s18 = ssub.s32 %s13, 1
      %s19 = ssub.s32 %s13, 2
      %s20 = sadd.s32 %s13, 1
      %s21 = ssub.s32 %s13, %s20
      %p22 = scmp.eq.s32.totalorder %s21, 0
      %s24 = sadd.s32 %s23, 1
      %s25 = scalar_select %p22, %s23, %s24
      %p28 = pneg %p22
      %p29 = scmp.eq.s32.totalorder %s13, 1
      %p30 = por %p28, %p29
      %p31 = scmp.ne.s32.totalorder %s23, %s26
      %p32 = scmp.eq.s32.totalorder %s13, 0
      %p33 = por %p31, %p32
      %p34 = scmp.ne.s32.totalorder %s23, %s26
      %p35 = scmp.eq.s32.totalorder %s18, 1
      %p36 = por %p34, %p35
      %p37 = scmp.ne.s32.totalorder %s26, %s27
      %p38 = scmp.eq.s32.totalorder %s18, 0
      %p39 = por %p37, %p38
      %p40 = scmp.ne.s32.totalorder %s26, %s27
      %p41 = scmp.eq.s32.totalorder %s19, 1
      %p42 = por %p40, %p41
      %p44 = scmp.ne.s32.totalorder %s27, %s43
      %p45 = scmp.eq.s32.totalorder %s19, 0
      %p46 = por %p44, %p45
      %s47 = ssub.s32 %s13, %s20
      %p48 = scmp.eq.s32.totalorder %s47, 0
      %s50 = sadd.s32 %s49, 1
      %s51 = scalar_select %p48, %s49, %s50
      %p54 = pneg %p48
      %p55 = scmp.eq.s32.totalorder %s13, 1
      %p56 = por %p54, %p55
      %p57 = scmp.ne.s32.totalorder %s49, %s52
      %p58 = scmp.eq.s32.totalorder %s13, 0
      %p59 = por %p57, %p58
      %p60 = scmp.ne.s32.totalorder %s49, %s52
      %p61 = scmp.eq.s32.totalorder %s18, 1
      %p62 = por %p60, %p61
      %p63 = scmp.ne.s32.totalorder %s52, %s53
      %p64 = scmp.eq.s32.totalorder %s18, 0
      %p65 = por %p63, %p64
      %p66 = scmp.ne.s32.totalorder %s52, %s53
      %p67 = scmp.eq.s32.totalorder %s19, 1
      %p68 = por %p66, %p67
      %p70 = scmp.ne.s32.totalorder %s53, %s69
      %p71 = scmp.eq.s32.totalorder %s19, 0
      %p72 = por %p70, %p71
      %p73 = scmp.le.s32.totalorder 1, %s13
      %p74 = scmp.lt.s32.totalorder %s13, 3
      %p75 = pnand %p73, %p74
      %p76 = pneg %p75
      // Predicated region
      $region9: #{tpu_custom_call.1} parent=5 // pred_check
        _
      $region10: #{tpu_custom_call.1} parent=5 // pred_check_branch
        %78 = sbr.rel (%p75) target = $region12
      $region11: #{tpu_custom_call.1} parent=5 // pred_region
        %s79 = ssub.s32 %s13, 1
      $region12: #{tpu_custom_call.1} parent=5 // pred_fallthru
        _
      %p80 = scmp.lt.s32.totalorder %s13, 2
      // Predicated region
      $region13: #{tpu_custom_call.1} parent=5 // pred_check
        %p81 = pneg %p80
      $region14: #{tpu_custom_call.1} parent=5 // pred_check_branch
        %83 = sbr.rel (%p81) target = $region16
      $region15: #{tpu_custom_call.1} parent=5 // pred_region
        // Predicated region
        $region17: #{tpu_custom_call.1} parent=15 // pred_check
          %p84 = pneg %p33
        $region18: #{tpu_custom_call.1} parent=15 // pred_check_branch
          %86 = sbr.rel (%p84) target = $region20
        $region19: #{tpu_custom_call.1} parent=15 // pred_region
          %s87 = sand.u32 %s23, 1
          %s88 = scalar_lea.sflag [#allocation3], %s87
          %s89 = sand.u32 %s23, 1
          %s90 = smul.addr %s89, 512
          %s91 = scalar_lea.vmem [#allocation2], %s90
          %s92 = smul.u32 32, %s13
          %s94 = ssub.s32 8192, 8192
          %95 = vsyncadd %s88, %s94
          %s96 = smul.addr %s92, 2
          %s97 = smul.addr %s96, 128
          %s98 = scalar_lea.hbm %s0, %s97
          %s99 = sshll.u32 %s91, 4
          %s100 = int_to_ptr.vmem [resolvable:$true] %s99
          %105 = dma.hbm_to_vmem [thread:$0]  %s98, 8192, %s100, %s88, 256, 256, 16
        $region20: #{tpu_custom_call.1} parent=15 // pred_fallthru
          _
      $region16: #{tpu_custom_call.1} parent=5 // pred_fallthru
        _
      %p106 = scmp.le.s32.totalorder 1, %s13
      %p107 = scmp.lt.s32.totalorder %s13, 3
      %p108 = pnand %p106, %p107
      %p109 = pneg %p108
      // Predicated region
      $region21: #{tpu_custom_call.1} parent=5 // pred_check
        _
      $region22: #{tpu_custom_call.1} parent=5 // pred_check_branch
        %111 = sbr.rel (%p108) target = $region24
      $region23: #{tpu_custom_call.1} parent=5 // pred_region
        %s112 = ssub.s32 %s13, 1
        %s113 = sand.u32 %s26, 1
        %s114 = scalar_lea.sflag [#allocation3], %s113
        %s115 = sand.u32 %s26, 1
        %s116 = smul.addr %s115, 512
        %s117 = scalar_lea.vmem [#allocation2], %s116
        // Predicated region
        $region25: #{tpu_custom_call.1} parent=23 // pred_check
          %p118 = pneg %p39
        $region26: #{tpu_custom_call.1} parent=23 // pred_check_branch
          %120 = sbr.rel (%p118) target = $region28
        $region27: #{tpu_custom_call.1} parent=23 // pred_region
          %121 = dma.done %s114, 8192
        $region28: #{tpu_custom_call.1} parent=23 // pred_fallthru
          _
        %s122 = sand.u32 %s26, 1
        %s123 = scalar_lea.sflag [#allocation3], %s122
        %s124 = sand.u32 %s26, 1
        %s125 = smul.addr %s124, 512
        %s126 = scalar_lea.vmem [#allocation2], %s125
        %p127 = pneg %p39
        %p128 = pneg %p36
        %p129 = pneg %p65
        %p130 = pneg %p62
        %s131 = sand.u32 %s52, 1
        %s132 = scalar_lea.sflag [#allocation4], %s131
        %s133 = sand.u32 %s52, 1
        %s134 = smul.addr %s133, 512
        %s135 = scalar_lea.vmem [#allocation5], %s134
        %s136 = smul.u32 32, %s18
        %s137 = smul.u32 32, %s18
        %v138 = vld [vmem:[%s117] sm:$0xff]
        %v139 = vld [vmem:[%s117 + $0x8] sm:$0xff]
        %v140 = vld [vmem:[%s117 + $0x10] sm:$0xff]
        %v141 = vld [vmem:[%s117 + $0x18] sm:$0xff]
        %v142 = vld [vmem:[%s117 + $0x20] sm:$0xff]
        %v143 = vld [vmem:[%s117 + $0x28] sm:$0xff]
        %v144 = vld [vmem:[%s117 + $0x30] sm:$0xff]
        %v145 = vld [vmem:[%s117 + $0x38] sm:$0xff]
        %v146 = vld [vmem:[%s117 + $0x40] sm:$0xff]
        %v147 = vld [vmem:[%s117 + $0x48] sm:$0xff]
        %v148 = vld [vmem:[%s117 + $0x50] sm:$0xff]
        %v149 = vld [vmem:[%s117 + $0x58] sm:$0xff]
        %v150 = vld [vmem:[%s117 + $0x60] sm:$0xff]
        %v151 = vld [vmem:[%s117 + $0x68] sm:$0xff]
        %v152 = vld [vmem:[%s117 + $0x70] sm:$0xff]
        %v153 = vld [vmem:[%s117 + $0x78] sm:$0xff]
        %v154 = vld [vmem:[%s117 + $0x80] sm:$0xff]
        %v155 = vld [vmem:[%s117 + $0x88] sm:$0xff]
        %v156 = vld [vmem:[%s117 + $0x90] sm:$0xff]
        %v157 = vld [vmem:[%s117 + $0x98] sm:$0xff]
        %v158 = vld [vmem:[%s117 + $0xa0] sm:$0xff]
        %v159 = vld [vmem:[%s117 + $0xa8] sm:$0xff]
        %v160 = vld [vmem:[%s117 + $0xb0] sm:$0xff]
        %v161 = vld [vmem:[%s117 + $0xb8] sm:$0xff]
        %v162 = vld [vmem:[%s117 + $0xc0] sm:$0xff]
        %v163 = vld [vmem:[%s117 + $0xc8] sm:$0xff]
        %v164 = vld [vmem:[%s117 + $0xd0] sm:$0xff]
        %v165 = vld [vmem:[%s117 + $0xd8] sm:$0xff]
        %v166 = vld [vmem:[%s117 + $0xe0] sm:$0xff]
        %v167 = vld [vmem:[%s117 + $0xe8] sm:$0xff]
        %v168 = vld [vmem:[%s117 + $0xf0] sm:$0xff]
        %v169 = vld [vmem:[%s117 + $0xf8] sm:$0xff]
        %v170 = vld [vmem:[%s117 + $0x100] sm:$0xff]
        %v171 = vld [vmem:[%s117 + $0x108] sm:$0xff]
        %v172 = vld [vmem:[%s117 + $0x110] sm:$0xff]
        %v173 = vld [vmem:[%s117 + $0x118] sm:$0xff]
        %v174 = vld [vmem:[%s117 + $0x120] sm:$0xff]
        %v175 = vld [vmem:[%s117 + $0x128] sm:$0xff]
        %v176 = vld [vmem:[%s117 + $0x130] sm:$0xff]
        %v177 = vld [vmem:[%s117 + $0x138] sm:$0xff]
        %v178 = vld [vmem:[%s117 + $0x140] sm:$0xff]
        %v179 = vld [vmem:[%s117 + $0x148] sm:$0xff]
        %v180 = vld [vmem:[%s117 + $0x150] sm:$0xff]
        %v181 = vld [vmem:[%s117 + $0x158] sm:$0xff]
        %v182 = vld [vmem:[%s117 + $0x160] sm:$0xff]
        %v183 = vld [vmem:[%s117 + $0x168] sm:$0xff]
        %v184 = vld [vmem:[%s117 + $0x170] sm:$0xff]
        %v185 = vld [vmem:[%s117 + $0x178] sm:$0xff]
        %v186 = vld [vmem:[%s117 + $0x180] sm:$0xff]
        %v187 = vld [vmem:[%s117 + $0x188] sm:$0xff]
        %v188 = vld [vmem:[%s117 + $0x190] sm:$0xff]
        %v189 = vld [vmem:[%s117 + $0x198] sm:$0xff]
        %v190 = vld [vmem:[%s117 + $0x1a0] sm:$0xff]
        %v191 = vld [vmem:[%s117 + $0x1a8] sm:$0xff]
        %v192 = vld [vmem:[%s117 + $0x1b0] sm:$0xff]
        %v193 = vld [vmem:[%s117 + $0x1b8] sm:$0xff]
        %v194 = vld [vmem:[%s117 + $0x1c0] sm:$0xff]
        %v195 = vld [vmem:[%s117 + $0x1c8] sm:$0xff]
        %v196 = vld [vmem:[%s117 + $0x1d0] sm:$0xff]
        %v197 = vld [vmem:[%s117 + $0x1d8] sm:$0xff]
        %v198 = vld [vmem:[%s117 + $0x1e0] sm:$0xff]
        %v199 = vld [vmem:[%s117 + $0x1e8] sm:$0xff]
        %v200 = vld [vmem:[%s117 + $0x1f0] sm:$0xff]
        %v201 = vld [vmem:[%s117 + $0x1f8] sm:$0xff]
        %v202 = vmul.f32 %v138, %v138
        %v203 = vmul.f32 %v139, %v139
        %v204 = vmul.f32 %v140, %v140
        %v205 = vmul.f32 %v141, %v141
        %v206 = vmul.f32 %v142, %v142
        %v207 = vmul.f32 %v143, %v143
        %v208 = vmul.f32 %v144, %v144
        %v209 = vmul.f32 %v145, %v145
        %v210 = vmul.f32 %v146, %v146
        %v211 = vmul.f32 %v147, %v147
        %v212 = vmul.f32 %v148, %v148
        %v213 = vmul.f32 %v149, %v149
        %v214 = vmul.f32 %v150, %v150
        %v215 = vmul.f32 %v151, %v151
        %v216 = vmul.f32 %v152, %v152
        %v217 = vmul.f32 %v153, %v153
        %v218 = vmul.f32 %v154, %v154
        %v219 = vmul.f32 %v155, %v155
        %v220 = vmul.f32 %v156, %v156
        %v221 = vmul.f32 %v157, %v157
        %v222 = vmul.f32 %v158, %v158
        %v223 = vmul.f32 %v159, %v159
        %v224 = vmul.f32 %v160, %v160
        %v225 = vmul.f32 %v161, %v161
        %v226 = vmul.f32 %v162, %v162
        %v227 = vmul.f32 %v163, %v163
        %v228 = vmul.f32 %v164, %v164
        %v229 = vmul.f32 %v165, %v165
        %v230 = vmul.f32 %v166, %v166
        %v231 = vmul.f32 %v167, %v167
        %v232 = vmul.f32 %v168, %v168
        %v233 = vmul.f32 %v169, %v169
        %v234 = vmul.f32 %v170, %v170
        %v235 = vmul.f32 %v171, %v171
        %v236 = vmul.f32 %v172, %v172
        %v237 = vmul.f32 %v173, %v173
        %v238 = vmul.f32 %v174, %v174
        %v239 = vmul.f32 %v175, %v175
        %v240 = vmul.f32 %v176, %v176
        %v241 = vmul.f32 %v177, %v177
        %v242 = vmul.f32 %v178, %v178
        %v243 = vmul.f32 %v179, %v179
        %v244 = vmul.f32 %v180, %v180
        %v245 = vmul.f32 %v181, %v181
        %v246 = vmul.f32 %v182, %v182
        %v247 = vmul.f32 %v183, %v183
        %v248 = vmul.f32 %v184, %v184
        %v249 = vmul.f32 %v185, %v185
        %v250 = vmul.f32 %v186, %v186
        %v251 = vmul.f32 %v187, %v187
        %v252 = vmul.f32 %v188, %v188
        %v253 = vmul.f32 %v189, %v189
        %v254 = vmul.f32 %v190, %v190
        %v255 = vmul.f32 %v191, %v191
        %v256 = vmul.f32 %v192, %v192
        %v257 = vmul.f32 %v193, %v193
        %v258 = vmul.f32 %v194, %v194
        %v259 = vmul.f32 %v195, %v195
        %v260 = vmul.f32 %v196, %v196
        %v261 = vmul.f32 %v197, %v197
        %v262 = vmul.f32 %v198, %v198
        %v263 = vmul.f32 %v199, %v199
        %v264 = vmul.f32 %v200, %v200
        %v265 = vmul.f32 %v201, %v201
        %v266 = vadd.f32 %v202, %v203
        %267 = vadd.xlane.f32.xlu0 %v266
        %v268 = vpop.xlane.xlu0 %267
        %v269 = vadd.f32 %v204, %v205
        %270 = vadd.xlane.f32.xlu0 %v269
        %v271 = vpop.xlane.xlu0 %270
        %v272 = vadd.f32 %v206, %v207
        %273 = vadd.xlane.f32.xlu0 %v272
        %v274 = vpop.xlane.xlu0 %273
        %v275 = vadd.f32 %v208, %v209
        %276 = vadd.xlane.f32.xlu0 %v275
        %v277 = vpop.xlane.xlu0 %276
        %v278 = vadd.f32 %v210, %v211
        %279 = vadd.xlane.f32.xlu0 %v278
        %v280 = vpop.xlane.xlu0 %279
        %v281 = vadd.f32 %v212, %v213
        %282 = vadd.xlane.f32.xlu0 %v281
        %v283 = vpop.xlane.xlu0 %282
        %v284 = vadd.f32 %v214, %v215
        %285 = vadd.xlane.f32.xlu0 %v284
        %v286 = vpop.xlane.xlu0 %285
        %v287 = vadd.f32 %v216, %v217
        %288 = vadd.xlane.f32.xlu0 %v287
        %v289 = vpop.xlane.xlu0 %288
        %v290 = vadd.f32 %v218, %v219
        %291 = vadd.xlane.f32.xlu0 %v290
        %v292 = vpop.xlane.xlu0 %291
        %v293 = vadd.f32 %v220, %v221
        %294 = vadd.xlane.f32.xlu0 %v293
        %v295 = vpop.xlane.xlu0 %294
        %v296 = vadd.f32 %v222, %v223
        %297 = vadd.xlane.f32.xlu0 %v296
        %v298 = vpop.xlane.xlu0 %297
        %v299 = vadd.f32 %v224, %v225
        %300 = vadd.xlane.f32.xlu0 %v299
        %v301 = vpop.xlane.xlu0 %300
        %v302 = vadd.f32 %v226, %v227
        %303 = vadd.xlane.f32.xlu0 %v302
        %v304 = vpop.xlane.xlu0 %303
        %v305 = vadd.f32 %v228, %v229
        %306 = vadd.xlane.f32.xlu0 %v305
        %v307 = vpop.xlane.xlu0 %306
        %v308 = vadd.f32 %v230, %v231
        %309 = vadd.xlane.f32.xlu0 %v308
        %v310 = vpop.xlane.xlu0 %309
        %v311 = vadd.f32 %v232, %v233
        %312 = vadd.xlane.f32.xlu0 %v311
        %v313 = vpop.xlane.xlu0 %312
        %v314 = vadd.f32 %v234, %v235
        %315 = vadd.xlane.f32.xlu0 %v314
        %v316 = vpop.xlane.xlu0 %315
        %v317 = vadd.f32 %v236, %v237
        %318 = vadd.xlane.f32.xlu0 %v317
        %v319 = vpop.xlane.xlu0 %318
        %v320 = vadd.f32 %v238, %v239
        %321 = vadd.xlane.f32.xlu0 %v320
        %v322 = vpop.xlane.xlu0 %321
        %v323 = vadd.f32 %v240, %v241
        %324 = vadd.xlane.f32.xlu0 %v323
        %v325 = vpop.xlane.xlu0 %324
        %v326 = vadd.f32 %v242, %v243
        %327 = vadd.xlane.f32.xlu0 %v326
        %v328 = vpop.xlane.xlu0 %327
        %v329 = vadd.f32 %v244, %v245
        %330 = vadd.xlane.f32.xlu0 %v329
        %v331 = vpop.xlane.xlu0 %330
        %v332 = vadd.f32 %v246, %v247
        %333 = vadd.xlane.f32.xlu0 %v332
        %v334 = vpop.xlane.xlu0 %333
        %v335 = vadd.f32 %v248, %v249
        %336 = vadd.xlane.f32.xlu0 %v335
        %v337 = vpop.xlane.xlu0 %336
        %v338 = vadd.f32 %v250, %v251
        %339 = vadd.xlane.f32.xlu0 %v338
        %v340 = vpop.xlane.xlu0 %339
        %v341 = vadd.f32 %v252, %v253
        %342 = vadd.xlane.f32.xlu0 %v341
        %v343 = vpop.xlane.xlu0 %342
        %v344 = vadd.f32 %v254, %v255
        %345 = vadd.xlane.f32.xlu0 %v344
        %v346 = vpop.xlane.xlu0 %345
        %v347 = vadd.f32 %v256, %v257
        %348 = vadd.xlane.f32.xlu0 %v347
        %v349 = vpop.xlane.xlu0 %348
        %v350 = vadd.f32 %v258, %v259
        %351 = vadd.xlane.f32.xlu0 %v350
        %v352 = vpop.xlane.xlu0 %351
        %v353 = vadd.f32 %v260, %v261
        %354 = vadd.xlane.f32.xlu0 %v353
        %v355 = vpop.xlane.xlu0 %354
        %v356 = vadd.f32 %v262, %v263
        %357 = vadd.xlane.f32.xlu0 %v356
        %v358 = vpop.xlane.xlu0 %357
        %v359 = vadd.f32 %v264, %v265
        %360 = vadd.xlane.f32.xlu0 %v359
        %v361 = vpop.xlane.xlu0 %360
        %v362 = vmax.f32 %v268, 1e-24
        %v363 = vmax.f32 %v271, 1e-24
        %v364 = vmax.f32 %v274, 1e-24
        %v365 = vmax.f32 %v277, 1e-24
        %v366 = vmax.f32 %v280, 1e-24
        %v367 = vmax.f32 %v283, 1e-24
        %v368 = vmax.f32 %v286, 1e-24
        %v369 = vmax.f32 %v289, 1e-24
        %v370 = vmax.f32 %v292, 1e-24
        %v371 = vmax.f32 %v295, 1e-24
        %v372 = vmax.f32 %v298, 1e-24
        %v373 = vmax.f32 %v301, 1e-24
        %v374 = vmax.f32 %v304, 1e-24
        %v375 = vmax.f32 %v307, 1e-24
        %v376 = vmax.f32 %v310, 1e-24
        %v377 = vmax.f32 %v313, 1e-24
        %v378 = vmax.f32 %v316, 1e-24
        %v379 = vmax.f32 %v319, 1e-24
        %v380 = vmax.f32 %v322, 1e-24
        %v381 = vmax.f32 %v325, 1e-24
        %v382 = vmax.f32 %v328, 1e-24
        %v383 = vmax.f32 %v331, 1e-24
        %v384 = vmax.f32 %v334, 1e-24
        %v385 = vmax.f32 %v337, 1e-24
        %v386 = vmax.f32 %v340, 1e-24
        %v387 = vmax.f32 %v343, 1e-24
        %v388 = vmax.f32 %v346, 1e-24
        %v389 = vmax.f32 %v349, 1e-24
        %v390 = vmax.f32 %v352, 1e-24
        %v391 = vmax.f32 %v355, 1e-24
        %v392 = vmax.f32 %v358, 1e-24
        %v393 = vmax.f32 %v361, 1e-24
        %v394 = vrsqrt.pop %v362
        %v395 = vrsqrt.pop %v363
        %v396 = vrsqrt.pop %v364
        %v397 = vrsqrt.pop %v365
        %v398 = vrsqrt.pop %v366
        %v399 = vrsqrt.pop %v367
        %v400 = vrsqrt.pop %v368
        %v401 = vrsqrt.pop %v369
        %v402 = vrsqrt.pop %v370
        %v403 = vrsqrt.pop %v371
        %v404 = vrsqrt.pop %v372
        %v405 = vrsqrt.pop %v373
        %v406 = vrsqrt.pop %v374
        %v407 = vrsqrt.pop %v375
        %v408 = vrsqrt.pop %v376
        %v409 = vrsqrt.pop %v377
        %v410 = vrsqrt.pop %v378
        %v411 = vrsqrt.pop %v379
        %v412 = vrsqrt.pop %v380
        %v413 = vrsqrt.pop %v381
        %v414 = vrsqrt.pop %v382
        %v415 = vrsqrt.pop %v383
        %v416 = vrsqrt.pop %v384
        %v417 = vrsqrt.pop %v385
        %v418 = vrsqrt.pop %v386
        %v419 = vrsqrt.pop %v387
        %v420 = vrsqrt.pop %v388
        %v421 = vrsqrt.pop %v389
        %v422 = vrsqrt.pop %v390
        %v423 = vrsqrt.pop %v391
        %v424 = vrsqrt.pop %v392
        %v425 = vrsqrt.pop %v393
        %v426 = vmul.f32 %v138, %v394
        %v427 = vmul.f32 %v139, %v394
        %v428 = vmul.f32 %v140, %v395
        %v429 = vmul.f32 %v141, %v395
        %v430 = vmul.f32 %v142, %v396
        %v431 = vmul.f32 %v143, %v396
        %v432 = vmul.f32 %v144, %v397
        %v433 = vmul.f32 %v145, %v397
        %v434 = vmul.f32 %v146, %v398
        %v435 = vmul.f32 %v147, %v398
        %v436 = vmul.f32 %v148, %v399
        %v437 = vmul.f32 %v149, %v399
        %v438 = vmul.f32 %v150, %v400
        %v439 = vmul.f32 %v151, %v400
        %v440 = vmul.f32 %v152, %v401
        %v441 = vmul.f32 %v153, %v401
        %v442 = vmul.f32 %v154, %v402
        %v443 = vmul.f32 %v155, %v402
        %v444 = vmul.f32 %v156, %v403
        %v445 = vmul.f32 %v157, %v403
        %v446 = vmul.f32 %v158, %v404
        %v447 = vmul.f32 %v159, %v404
        %v448 = vmul.f32 %v160, %v405
        %v449 = vmul.f32 %v161, %v405
        %v450 = vmul.f32 %v162, %v406
        %v451 = vmul.f32 %v163, %v406
        %v452 = vmul.f32 %v164, %v407
        %v453 = vmul.f32 %v165, %v407
        %v454 = vmul.f32 %v166, %v408
        %v455 = vmul.f32 %v167, %v408
        %v456 = vmul.f32 %v168, %v409
        %v457 = vmul.f32 %v169, %v409
        %v458 = vmul.f32 %v170, %v410
        %v459 = vmul.f32 %v171, %v410
        %v460 = vmul.f32 %v172, %v411
        %v461 = vmul.f32 %v173, %v411
        %v462 = vmul.f32 %v174, %v412
        %v463 = vmul.f32 %v175, %v412
        %v464 = vmul.f32 %v176, %v413
        %v465 = vmul.f32 %v177, %v413
        %v466 = vmul.f32 %v178, %v414
        %v467 = vmul.f32 %v179, %v414
        %v468 = vmul.f32 %v180, %v415
        %v469 = vmul.f32 %v181, %v415
        %v470 = vmul.f32 %v182, %v416
        %v471 = vmul.f32 %v183, %v416
        %v472 = vmul.f32 %v184, %v417
        %v473 = vmul.f32 %v185, %v417
        %v474 = vmul.f32 %v186, %v418
        %v475 = vmul.f32 %v187, %v418
        %v476 = vmul.f32 %v188, %v419
        %v477 = vmul.f32 %v189, %v419
        %v478 = vmul.f32 %v190, %v420
        %v479 = vmul.f32 %v191, %v420
        %v480 = vmul.f32 %v192, %v421
        %v481 = vmul.f32 %v193, %v421
        %v482 = vmul.f32 %v194, %v422
        %v483 = vmul.f32 %v195, %v422
        %v484 = vmul.f32 %v196, %v423
        %v485 = vmul.f32 %v197, %v423
        %v486 = vmul.f32 %v198, %v424
        %v487 = vmul.f32 %v199, %v424
        %v488 = vmul.f32 %v200, %v425
        %v489 = vmul.f32 %v201, %v425
        %490 = vst [vmem:[%s135] sm:$0xff] %v426
        %491 = vst [vmem:[%s135 + $0x8] sm:$0xff] %v427
        %492 = vst [vmem:[%s135 + $0x10] sm:$0xff] %v428
        %493 = vst [vmem:[%s135 + $0x18] sm:$0xff] %v429
        %494 = vst [vmem:[%s135 + $0x20] sm:$0xff] %v430
        %495 = vst [vmem:[%s135 + $0x28] sm:$0xff] %v431
        %496 = vst [vmem:[%s135 + $0x30] sm:$0xff] %v432
        %497 = vst [vmem:[%s135 + $0x38] sm:$0xff] %v433
        %498 = vst [vmem:[%s135 + $0x40] sm:$0xff] %v434
        %499 = vst [vmem:[%s135 + $0x48] sm:$0xff] %v435
        %500 = vst [vmem:[%s135 + $0x50] sm:$0xff] %v436
        %501 = vst [vmem:[%s135 + $0x58] sm:$0xff] %v437
        %502 = vst [vmem:[%s135 + $0x60] sm:$0xff] %v438
        %503 = vst [vmem:[%s135 + $0x68] sm:$0xff] %v439
        %504 = vst [vmem:[%s135 + $0x70] sm:$0xff] %v440
        %505 = vst [vmem:[%s135 + $0x78] sm:$0xff] %v441
        %506 = vst [vmem:[%s135 + $0x80] sm:$0xff] %v442
        %507 = vst [vmem:[%s135 + $0x88] sm:$0xff] %v443
        %508 = vst [vmem:[%s135 + $0x90] sm:$0xff] %v444
        %509 = vst [vmem:[%s135 + $0x98] sm:$0xff] %v445
        %510 = vst [vmem:[%s135 + $0xa0] sm:$0xff] %v446
        %511 = vst [vmem:[%s135 + $0xa8] sm:$0xff] %v447
        %512 = vst [vmem:[%s135 + $0xb0] sm:$0xff] %v448
        %513 = vst [vmem:[%s135 + $0xb8] sm:$0xff] %v449
        %514 = vst [vmem:[%s135 + $0xc0] sm:$0xff] %v450
        %515 = vst [vmem:[%s135 + $0xc8] sm:$0xff] %v451
        %516 = vst [vmem:[%s135 + $0xd0] sm:$0xff] %v452
        %517 = vst [vmem:[%s135 + $0xd8] sm:$0xff] %v453
        %518 = vst [vmem:[%s135 + $0xe0] sm:$0xff] %v454
        %519 = vst [vmem:[%s135 + $0xe8] sm:$0xff] %v455
        %520 = vst [vmem:[%s135 + $0xf0] sm:$0xff] %v456
        %521 = vst [vmem:[%s135 + $0xf8] sm:$0xff] %v457
        %522 = vst [vmem:[%s135 + $0x100] sm:$0xff] %v458
        %523 = vst [vmem:[%s135 + $0x108] sm:$0xff] %v459
        %524 = vst [vmem:[%s135 + $0x110] sm:$0xff] %v460
        %525 = vst [vmem:[%s135 + $0x118] sm:$0xff] %v461
        %526 = vst [vmem:[%s135 + $0x120] sm:$0xff] %v462
        %527 = vst [vmem:[%s135 + $0x128] sm:$0xff] %v463
        %528 = vst [vmem:[%s135 + $0x130] sm:$0xff] %v464
        %529 = vst [vmem:[%s135 + $0x138] sm:$0xff] %v465
        %530 = vst [vmem:[%s135 + $0x140] sm:$0xff] %v466
        %531 = vst [vmem:[%s135 + $0x148] sm:$0xff] %v467
        %532 = vst [vmem:[%s135 + $0x150] sm:$0xff] %v468
        %533 = vst [vmem:[%s135 + $0x158] sm:$0xff] %v469
        %534 = vst [vmem:[%s135 + $0x160] sm:$0xff] %v470
        %535 = vst [vmem:[%s135 + $0x168] sm:$0xff] %v471
        %536 = vst [vmem:[%s135 + $0x170] sm:$0xff] %v472
        %537 = vst [vmem:[%s135 + $0x178] sm:$0xff] %v473
        %538 = vst [vmem:[%s135 + $0x180] sm:$0xff] %v474
        %539 = vst [vmem:[%s135 + $0x188] sm:$0xff] %v475
        %540 = vst [vmem:[%s135 + $0x190] sm:$0xff] %v476
        %541 = vst [vmem:[%s135 + $0x198] sm:$0xff] %v477
        %542 = vst [vmem:[%s135 + $0x1a0] sm:$0xff] %v478
        %543 = vst [vmem:[%s135 + $0x1a8] sm:$0xff] %v479
        %544 = vst [vmem:[%s135 + $0x1b0] sm:$0xff] %v480
        %545 = vst [vmem:[%s135 + $0x1b8] sm:$0xff] %v481
        %546 = vst [vmem:[%s135 + $0x1c0] sm:$0xff] %v482
        %547 = vst [vmem:[%s135 + $0x1c8] sm:$0xff] %v483
        %548 = vst [vmem:[%s135 + $0x1d0] sm:$0xff] %v484
        %549 = vst [vmem:[%s135 + $0x1d8] sm:$0xff] %v485
        %550 = vst [vmem:[%s135 + $0x1e0] sm:$0xff] %v486
        %551 = vst [vmem:[%s135 + $0x1e8] sm:$0xff] %v487
        %552 = vst [vmem:[%s135 + $0x1f0] sm:$0xff] %v488
        %553 = vst [vmem:[%s135 + $0x1f8] sm:$0xff] %v489
        %s554 = sand.u32 %s52, 1
        %s555 = scalar_lea.sflag [#allocation4], %s554
        %s556 = sand.u32 %s52, 1
        %s557 = smul.addr %s556, 512
        %s558 = scalar_lea.vmem [#allocation5], %s557
        // Predicated region
        $region29: #{tpu_custom_call.1} parent=23 // pred_check
          %p559 = pneg %p62
        $region30: #{tpu_custom_call.1} parent=23 // pred_check_branch
          %561 = sbr.rel (%p559) target = $region32
        $region31: #{tpu_custom_call.1} parent=23 // pred_region
          %s562 = smul.u32 32, %s18
          %s564 = ssub.s32 8192, 8192
          %565 = vsyncadd %s555, %s564
          %s566 = smul.addr %s562, 2
          %s567 = smul.addr %s566, 128
          %s568 = scalar_lea.hbm %s1, %s567
          %s569 = sshll.u32 %s558, 4
          %s570 = int_to_ptr.vmem [resolvable:$true] %s569
          %575 = dma.vmem_to_hbm [thread:$0]  %s570, 8192, %s568, %s555, 256, 256, 16
        $region32: #{tpu_custom_call.1} parent=23 // pred_fallthru
          _
      $region24: #{tpu_custom_call.1} parent=5 // pred_fallthru
        _
      %p576 = scmp.le.s32.totalorder 2, %s13
      // Predicated region
      $region33: #{tpu_custom_call.1} parent=5 // pred_check
        %p577 = pneg %p576
      $region34: #{tpu_custom_call.1} parent=5 // pred_check_branch
        %579 = sbr.rel (%p577) target = $region36
      $region35: #{tpu_custom_call.1} parent=5 // pred_region
        %s580 = ssub.s32 %s13, 2
        // Predicated region
        $region37: #{tpu_custom_call.1} parent=35 // pred_check
          %p581 = pneg %p68
        $region38: #{tpu_custom_call.1} parent=35 // pred_check_branch
          %583 = sbr.rel (%p581) target = $region40
        $region39: #{tpu_custom_call.1} parent=35 // pred_region
          %s584 = sand.u32 %s53, 1
          %s585 = scalar_lea.sflag [#allocation4], %s584
          %s586 = sand.u32 %s53, 1
          %s587 = smul.addr %s586, 512
          %s588 = scalar_lea.vmem [#allocation5], %s587
          %589 = dma.done %s585, 8192
        $region40: #{tpu_custom_call.1} parent=35 // pred_fallthru
          _
      $region36: #{tpu_custom_call.1} parent=5 // pred_fallthru
        _
    $region6: #{tpu_custom_call.1} parent=1 // loop_footer
      %s17 = sadd.s32 1, %s13
    $region7: #{tpu_custom_call.1} parent=1 // loop_footer_branch
      %12 = sbr.rel target = $region3
    $region8: #{tpu_custom_call.1} parent=1 // loop_exit
      _
    %590 = vsyncpa [#allocation3], 1
    %s591 = scalar_lea.sflag [#allocation3], 1
    %592 = vsyncpa %s591, 1
    %593 = vsyncpa [#allocation4], 1
    %s594 = scalar_lea.sflag [#allocation4], 1
    %595 = vsyncpa %s594, 1

</llo_original>
